<compile_context>
chip_gen: v5e
topology: v5e:2x2
jax: 0.10.0
libtpu: 0.0.40
codegen_flags: <defaults>
</compile_context>

<pallas_src>
import functools

import jax
import jax.numpy as jnp
from jax.experimental import pallas as pl
from jax.experimental.pallas import tpu as pltpu


def _mlp_kernel(x_ref, w1_ref, b1_ref, w2_ref, b2_ref, o_ref):
    # fc1: bf16 MXU matmul, f32 accumulation.
    x = x_ref[...].astype(jnp.bfloat16)
    h = jnp.dot(x, w1_ref[...], preferred_element_type=jnp.float32)
    h = h + b1_ref[...]                       # f32 epilogue (broadcast bias)
    # ELU (alpha=1): h if h > 0 else exp(h) - 1.  min() keeps exp's argument
    # <= 0 so the untaken branch never overflows; exp runs on the EUP slot.
    h = jnp.where(h > 0.0, h, jnp.exp(jnp.minimum(h, 0.0)) - 1.0)
    # fc2: bf16 MXU matmul, f32 accumulation; bias add in f32.
    y = jnp.dot(h.astype(jnp.bfloat16), w2_ref[...],
                preferred_element_type=jnp.float32)
    o_ref[...] = y + b2_ref[...]


def _round_up(n, m):
    return ((n + m - 1) // m) * m


@functools.partial(jax.jit, static_argnames=("batch_tile",))
def mlp_forward(x, params, *, batch_tile=256):
    """x: (B, input_dims) f32.
    params: (w1 bf16 (Din,Hp), b1 f32 (1,Hp), w2 bf16 (Hp,Dout), b2 f32 (1,Dout)),
    hidden dim already zero-padded to a multiple of 128."""
    w1, b1, w2, b2 = params
    B, d_in = x.shape
    d_out = w2.shape[1]

    if B <= batch_tile:
        # --- Small-batch path: single gridless call, everything VMEM-resident.
        return pl.pallas_call(
            _mlp_kernel,
            out_shape=jax.ShapeDtypeStruct((B, d_out), jnp.float32),
            in_specs=[
                pl.BlockSpec(memory_space=pltpu.MemorySpace.VMEM),  # x  (B, Din)
                pl.BlockSpec(memory_space=pltpu.MemorySpace.VMEM),  # w1 (Din, Hp) bf16
                pl.BlockSpec(memory_space=pltpu.MemorySpace.VMEM),  # b1 (1, Hp)   f32
                pl.BlockSpec(memory_space=pltpu.MemorySpace.VMEM),  # w2 (Hp, Dout) bf16
                pl.BlockSpec(memory_space=pltpu.MemorySpace.VMEM),  # b2 (1, Dout) f32
            ],
            out_specs=pl.BlockSpec(memory_space=pltpu.MemorySpace.VMEM),
        )(x, w1, b1, w2, b2)

    # --- Large-batch path: tile the batch axis; weights stay full-extent
    # (same block at every grid step -> resident across the pipeline).
    hp = w1.shape[1]
    bp = _round_up(B, batch_tile)
    if bp != B:
        x = jnp.pad(x, ((0, bp - B), (0, 0)))
    out = pl.pallas_call(
        _mlp_kernel,
        out_shape=jax.ShapeDtypeStruct((bp, d_out), jnp.float32),
        grid=(bp // batch_tile,),
        in_specs=[
            pl.BlockSpec((batch_tile, d_in), lambda i: (i, 0)),
            pl.BlockSpec((d_in, hp), lambda i: (0, 0)),
            pl.BlockSpec((1, hp), lambda i: (0, 0)),
            pl.BlockSpec((hp, d_out), lambda i: (0, 0)),
            pl.BlockSpec((1, d_out), lambda i: (0, 0)),
        ],
        out_specs=pl.BlockSpec((batch_tile, d_out), lambda i: (i, 0)),
        compiler_params=pltpu.CompilerParams(
            dimension_semantics=("parallel",)),
    )(x, w1, b1, w2, b2)
    return out[:B]


def init_params(key, input_dims, output_dims):
    """nn.Linear-style init (uniform +/- 1/sqrt(fan_in)), weights stored as
    (in_features, out_features).  Returns (padded bf16 kernel params,
    raw f32 params for the pure-JAX reference check)."""
    hidden = (input_dims + output_dims) // 2
    hp = max(128, _round_up(hidden, 128))     # lane/MXU-aligned hidden dim
    k1, k2, k3, k4 = jax.random.split(key, 4)
    bound1 = 1.0 / jnp.sqrt(input_dims)
    bound2 = 1.0 / jnp.sqrt(hidden)
    w1 = jax.random.uniform(k1, (input_dims, hidden), jnp.float32, -bound1, bound1)
    b1 = jax.random.uniform(k2, (1, hidden), jnp.float32, -bound1, bound1)
    w2 = jax.random.uniform(k3, (hidden, output_dims), jnp.float32, -bound2, bound2)
    b2 = jax.random.uniform(k4, (1, output_dims), jnp.float32, -bound2, bound2)

    # Zero-pad the hidden dim once, outside the kernel (exactness: ELU(0)=0 and
    # the padded rows of w2 are zero, so padded == un-padded network).
    w1p = jnp.zeros((input_dims, hp), jnp.float32).at[:, :hidden].set(w1)
    b1p = jnp.zeros((1, hp), jnp.float32).at[:, :hidden].set(b1)
    w2p = jnp.zeros((hp, output_dims), jnp.float32).at[:hidden, :].set(w2)

    kernel_params = (w1p.astype(jnp.bfloat16), b1p,
                     w2p.astype(jnp.bfloat16), b2)
    raw_params = (w1, b1, w2, b2)
    return kernel_params, raw_params


def _reference(x, raw_params):
    w1, b1, w2, b2 = raw_params
    h = x @ w1 + b1
    h = jnp.where(h > 0.0, h, jnp.exp(jnp.minimum(h, 0.0)) - 1.0)
    return h @ w2 + b2


if __name__ == "__main__":
    # Small shapes consistent with the module's forward.
    B = 2
    input_dims = 32
    output_dims = 16          # hidden = (32 + 16) // 2 = 24, padded to 128

    key = jax.random.PRNGKey(0)
    k_x, k_params, k_big = jax.random.split(key, 3)
    x = jax.random.normal(k_x, (B, input_dims), jnp.float32)
    kernel_params, raw_params = init_params(k_params, input_dims, output_dims)

    # Small-batch (gridless) path.
    out = jax.block_until_ready(mlp_forward(x, kernel_params))
    ref = _reference(x, raw_params)
    assert out.shape == (B, output_dims)
    # bf16 weights/activations on the MXU vs f32 reference -> loose tolerance.
    assert jnp.allclose(out, ref, atol=2e-2, rtol=2e-2), (
        f"max abs err {jnp.max(jnp.abs(out - ref))}")

    # Large-batch (batch-tiled, 'parallel' grid) path, non-multiple of the tile.
    Bb = 500
    xb = jax.random.normal(k_big, (Bb, input_dims), jnp.float32)
    out_b = jax.block_until_ready(mlp_forward(xb, kernel_params))
    ref_b = _reference(xb, raw_params)
    assert out_b.shape == (Bb, output_dims)
    assert jnp.allclose(out_b, ref_b, atol=2e-2, rtol=2e-2), (
        f"max abs err {jnp.max(jnp.abs(out_b - ref_b))}")

    print("KERNEL_OK")
</pallas_src>

<mosaic_0001>
module attributes {stable_mosaic.version = 11 : i64} {
  func.func @_mlp_kernel(%arg0: memref<2x32xf32, #tpu.memory_space<vmem>>, %arg1: memref<32x128xbf16, #tpu.memory_space<vmem>>, %arg2: memref<1x128xf32, #tpu.memory_space<vmem>>, %arg3: memref<128x16xbf16, #tpu.memory_space<vmem>>, %arg4: memref<1x16xf32, #tpu.memory_space<vmem>>, %arg5: memref<2x16xf32, #tpu.memory_space<vmem>>) attributes {dimension_semantics = [], scalar_prefetch = 0 : i64, scratch_operands = 0 : i64, tpu.core_type = #tpu.core_type<tc>} {
    %c0 = arith.constant 0 : index
    %c0_0 = arith.constant 0 : index
    %0 = vector.load %arg0[%c0, %c0_0] : memref<2x32xf32, #tpu.memory_space<vmem>>, vector<2x32xf32>
    %1 = arith.truncf %0 : vector<2x32xf32> to vector<2x32xbf16>
    %c0_1 = arith.constant 0 : index
    %c0_2 = arith.constant 0 : index
    %2 = vector.load %arg1[%c0_1, %c0_2] : memref<32x128xbf16, #tpu.memory_space<vmem>>, vector<32x128xbf16>
    %cst = arith.constant dense<0.000000e+00> : vector<2x128xf32>
    %3 = tpu.matmul %1, %2, %cst {dimension_numbers = #tpu.dot_dimension_numbers<[1], [0], [0], [1], [0, 0, 1, 1], [], []>} : vector<2x32xbf16>, vector<32x128xbf16>, vector<2x128xf32> -> vector<2x128xf32>
    %c0_3 = arith.constant 0 : index
    %c0_4 = arith.constant 0 : index
    %4 = vector.load %arg2[%c0_3, %c0_4] : memref<1x128xf32, #tpu.memory_space<vmem>>, vector<1x128xf32>
    %5 = vector.broadcast %4 : vector<1x128xf32> to vector<2x128xf32>
    %6 = arith.addf %3, %5 : vector<2x128xf32>
    %cst_5 = arith.constant 0.000000e+00 : f32
    %7 = vector.broadcast %cst_5 : f32 to vector<2x128xf32>
    %8 = arith.cmpf ogt, %6, %7 : vector<2x128xf32>
    %cst_6 = arith.constant 0.000000e+00 : f32
    %9 = vector.broadcast %cst_6 : f32 to vector<2x128xf32>
    %10 = arith.minimumf %6, %9 : vector<2x128xf32>
    %11 = math.exp %10 : vector<2x128xf32>
    %cst_7 = arith.constant 1.000000e+00 : f32
    %12 = vector.broadcast %cst_7 : f32 to vector<2x128xf32>
    %13 = arith.subf %11, %12 : vector<2x128xf32>
    %14 = arith.select %8, %6, %13 : vector<2x128xi1>, vector<2x128xf32>
    %15 = arith.truncf %14 : vector<2x128xf32> to vector<2x128xbf16>
    %c0_8 = arith.constant 0 : index
    %c0_9 = arith.constant 0 : index
    %16 = vector.load %arg3[%c0_8, %c0_9] : memref<128x16xbf16, #tpu.memory_space<vmem>>, vector<128x16xbf16>
    %cst_10 = arith.constant dense<0.000000e+00> : vector<2x16xf32>
    %17 = tpu.matmul %15, %16, %cst_10 {dimension_numbers = #tpu.dot_dimension_numbers<[1], [0], [0], [1], [0, 0, 1, 1], [], []>} : vector<2x128xbf16>, vector<128x16xbf16>, vector<2x16xf32> -> vector<2x16xf32>
    %c0_11 = arith.constant 0 : index
    %c0_12 = arith.constant 0 : index
    %18 = vector.load %arg4[%c0_11, %c0_12] : memref<1x16xf32, #tpu.memory_space<vmem>>, vector<1x16xf32>
    %19 = vector.broadcast %18 : vector<1x16xf32> to vector<2x16xf32>
    %20 = arith.addf %17, %19 : vector<2x16xf32>
    %c0_13 = arith.constant 0 : index
    %c0_14 = arith.constant 0 : index
    %21 = vector.load %arg5[%c0_13, %c0_14] : memref<2x16xf32, #tpu.memory_space<vmem>>, vector<2x16xf32>
    tpu.vector_store %arg5[%c0_13, %c0_14], %20 {strides = array<i32>} : memref<2x16xf32, #tpu.memory_space<vmem>>, vector<2x16xf32>,
    return
  }
}

</mosaic_0001>

<llo_original>
// kernel: mlp_forward.1
$region0: #{mlp_forward.1}
  #allocation0 [shape = 'u32[]', space=smem, size = 0x4, offset = 0x4, fixed_abs, tag = 'smem constant byte address 0x4 - core index']
  #allocation1 [shape = 'u32[72,128]{1,0:T(1,128)}', space=vmem, size = 0x9000, scoped, tag = 'internal scratch']
  %s0 = inlined_call_operand.vmem [shape: f32[2,32], index: 0, kind: input, shape index: {}]
  %s1 = inlined_call_operand.vmem [shape: bf16[32,128], index: 1, kind: input, shape index: {}]
  %s2 = inlined_call_operand.vmem [shape: f32[1,128], index: 2, kind: input, shape index: {}]
  %s3 = inlined_call_operand.vmem [shape: bf16[128,16], index: 3, kind: input, shape index: {}]
  %s4 = inlined_call_operand.vmem [shape: f32[1,16], index: 4, kind: input, shape index: {}]
  %s5 = inlined_call_operand.hbm [shape: f32[2,16], index: 5, kind: output, shape index: {}]
  %s6 = sld [smem:[#allocation0]]
  $region30: #{mlp_forward.1} parent=0
    _
  %s8 = ssub.s32 1, %s6
  %s9 = scalar_select 0, %s8, %s6
  $region1: #{mlp_forward.1} parent=0
    #allocation2 [shape = 'u8[1024]{0}', space=vmem, size = 0x400, scoped, tag = 'output window, operand 0, single buffered']
    #allocation3 [shape = 's32[1]{0}', space=sflag, size = 0x4, scoped, tag = 'scoped memory for mlp_forward.1']
    %10 = vsyncpa [#allocation3], 0
    // Predicated region
    $region2: #{mlp_forward.1} parent=1 // pred_check
      _
    $region3: #{mlp_forward.1} parent=1 // pred_check_branch
      %12 = sbr.rel (0) target = $region5
    $region4: #{mlp_forward.1} parent=1 // pred_region
      _
    $region5: #{mlp_forward.1} parent=1 // pred_fallthru
      _
    // Predicated region
    $region6: #{mlp_forward.1} parent=1 // pred_check
      _
    $region7: #{mlp_forward.1} parent=1 // pred_check_branch
      %14 = sbr.rel (0) target = $region9
    $region8: #{mlp_forward.1} parent=1 // pred_region
      _
    $region9: #{mlp_forward.1} parent=1 // pred_fallthru
      _
    // Predicated region
    $region10: #{mlp_forward.1} parent=1 // pred_check
      _
    $region11: #{mlp_forward.1} parent=1 // pred_check_branch
      %16 = sbr.rel (0) target = $region13
    $region12: #{mlp_forward.1} parent=1 // pred_region
      _
    $region13: #{mlp_forward.1} parent=1 // pred_fallthru
      _
    // Predicated region
    $region14: #{mlp_forward.1} parent=1 // pred_check
      _
    $region15: #{mlp_forward.1} parent=1 // pred_check_branch
      %18 = sbr.rel (0) target = $region17
    $region16: #{mlp_forward.1} parent=1 // pred_region
      _
    $region17: #{mlp_forward.1} parent=1 // pred_fallthru
      _
    // Predicated region
    $region18: #{mlp_forward.1} parent=1 // pred_check
      _
    $region19: #{mlp_forward.1} parent=1 // pred_check_branch
      %20 = sbr.rel (0) target = $region21
    $region20: #{mlp_forward.1} parent=1 // pred_region
      _
    $region21: #{mlp_forward.1} parent=1 // pred_fallthru
      _
    %v22 = vld [vmem:[%s0] sm:$0x3]
    %v23 = vpack.c.bf16 %v22, %v22
    %v24 = vld [vmem:[%s1] sm:$0xf]
    %v25 = vld [vmem:[%s1 + $0x4] sm:$0xf]
    %v26 = vld [vmem:[%s1 + $0x8] sm:$0xf]
    %v27 = vld [vmem:[%s1 + $0xc] sm:$0xf]
    %v28 = vld [vmem:[%s2] sm:$0x1]
    %v30 = vperm.slane %v28, 0
    %v36 = vunpack.c.l.b16 %v24
    %v37 = vunpack.c.l.b16 %v25
    %v38 = vunpack.c.l.b16 %v26
    %v39 = vunpack.c.l.b16 %v27
    %v40 = vpack.c.b16 %v37, %v36
    %v41 = vpack.c.b16 %v39, %v38
    %vm44 = vcmask 261120
    %v46 = vsel %vm44, %v23, 0
    %48 = vmatpush.bf16.msra.mxu0 0
    %49 = vmatpush.bf16.msra.mxu0 0
    %50 = vmatpush.bf16.msra.mxu0 0
    %51 = vmatpush.bf16.msra.mxu0 0
    %52 = vmatpush.bf16.msra.mxu0 0
    %53 = vmatpush.bf16.msra.mxu0 0
    %54 = vmatpush.bf16.msra.mxu0 %v41
    %55 = vmatpush.bf16.msra.mxu0 %v40
    %56 = vmatmul.bf16.gmra.mxu0 %v46
    %v57 = vpop.f32.mrf.mxu0
    %v58 = vadd.f32 %v30, %v57
    %v59 = vpop.f32.mrf.mxu0
    %60 = vdwg.mxu0
    %vm61 = vcmp.gt.f32.partialorder %v58, 0.0
    %v62 = vmin.f32 %v58, 0.0
    %v63 = vmul.f32 %v62, 1.442695
    %v64 = vpow.pop %v63
    %v65 = vsub.f32 %v64, 1.0
    %v66 = vsel %vm61, %v58, %v65
    %v67 = vpack.c.bf16 %v66, %v66
    %v68 = vld [vmem:[%s3] sm:$0xf]
    %v69 = vld [vmem:[%s3 + $0x4] sm:$0xf]
    %v70 = vld [vmem:[%s3 + $0x8] sm:$0xf]
    %v71 = vld [vmem:[%s3 + $0xc] sm:$0xf]
    %v72 = vld [vmem:[%s3 + $0x10] sm:$0xf]
    %v73 = vld [vmem:[%s3 + $0x14] sm:$0xf]
    %v74 = vld [vmem:[%s3 + $0x18] sm:$0xf]
    %v75 = vld [vmem:[%s3 + $0x1c] sm:$0xf]
    %v76 = vld [vmem:[%s3 + $0x20] sm:$0xf]
    %v77 = vld [vmem:[%s3 + $0x24] sm:$0xf]
    %v78 = vld [vmem:[%s3 + $0x28] sm:$0xf]
    %v79 = vld [vmem:[%s3 + $0x2c] sm:$0xf]
    %v80 = vld [vmem:[%s3 + $0x30] sm:$0xf]
    %v81 = vld [vmem:[%s3 + $0x34] sm:$0xf]
    %v82 = vld [vmem:[%s3 + $0x38] sm:$0xf]
    %v83 = vld [vmem:[%s3 + $0x3c] sm:$0xf]
    %v84 = vld [vmem:[%s4] sm:$0x1]
    %v86 = vperm.slane %v84, 0
    %v104 = vunpack.c.l.b16 %v68
    %v105 = vunpack.c.l.b16 %v69
    %v106 = vunpack.c.l.b16 %v70
    %v107 = vunpack.c.l.b16 %v71
    %v108 = vunpack.c.l.b16 %v72
    %v109 = vunpack.c.l.b16 %v73
    %v110 = vunpack.c.l.b16 %v74
    %v111 = vunpack.c.l.b16 %v75
    %v112 = vunpack.c.l.b16 %v76
    %v113 = vunpack.c.l.b16 %v77
    %v114 = vunpack.c.l.b16 %v78
    %v115 = vunpack.c.l.b16 %v79
    %v116 = vunpack.c.l.b16 %v80
    %v117 = vunpack.c.l.b16 %v81
    %v118 = vunpack.c.l.b16 %v82
    %v119 = vunpack.c.l.b16 %v83
    %v120 = vpack.c.b16 %v105, %v104
    %v121 = vpack.c.b16 %v107, %v106
    %v122 = vpack.c.b16 %v109, %v108
    %v123 = vpack.c.b16 %v111, %v110
    %v124 = vpack.c.b16 %v113, %v112
    %v125 = vpack.c.b16 %v115, %v114
    %v126 = vpack.c.b16 %v117, %v116
    %v127 = vpack.c.b16 %v119, %v118
    %136 = vmatpush.bf16.msra.mxu0 %v127
    %137 = vmatpush.bf16.msra.mxu0 %v126
    %138 = vmatpush.bf16.msra.mxu0 %v125
    %139 = vmatpush.bf16.msra.mxu0 %v124
    %140 = vmatpush.bf16.msra.mxu0 %v123
    %141 = vmatpush.bf16.msra.mxu0 %v122
    %142 = vmatpush.bf16.msra.mxu0 %v121
    %143 = vmatpush.bf16.msra.mxu0 %v120
    %144 = vmatmul.bf16.gmra.mxu0 %v67
    %v145 = vpop.f32.mrf.mxu0
    %v146 = vadd.f32 %v86, %v145
    %v147 = vpop.f32.mrf.mxu0
    %148 = vdwg.mxu0
    %vm149 = vcmask 123904
    %150 = vst.msk [vmem:[#allocation2] sm:$0x3] %vm149, %v146
    // Predicated region
    $region22: #{mlp_forward.1} parent=1 // pred_check
      _
    $region23: #{mlp_forward.1} parent=1 // pred_check_branch
      %152 = sbr.rel (0) target = $region25
    $region24: #{mlp_forward.1} parent=1 // pred_region
      %154 = vsyncadd [#allocation3], 0
      %s156 = sshll.u32 [#allocation2], 4
      %s157 = int_to_ptr.vmem [resolvable:$true] %s156
      %s158 = sshll.u32 %s5, 4
      %s159 = int_to_ptr.hbm [resolvable:$true] %s158
      %161 = dma.vmem_to_hbm [thread:$0]  %s157, 32, %s159, [#allocation3]
    $region25: #{mlp_forward.1} parent=1 // pred_fallthru
      _
    // Predicated region
    $region26: #{mlp_forward.1} parent=1 // pred_check
      _
    $region27: #{mlp_forward.1} parent=1 // pred_check_branch
      %163 = sbr.rel (0) target = $region29
    $region28: #{mlp_forward.1} parent=1 // pred_region
      %165 = dma.done [#allocation3], 32
    $region29: #{mlp_forward.1} parent=1 // pred_fallthru
      _
    %166 = vsyncpa [#allocation3], 1

</llo_original>
